<compile_context>
chip_gen: v7x
topology: tpu7x:2x2x1
jax: 0.10.0
libtpu: 0.0.40
codegen_flags: <defaults>
</compile_context>

<pallas_src>
import functools

import jax
import jax.numpy as jnp
from jax.experimental import pallas as pl
from jax.experimental.pallas import tpu as pltpu

# ----------------------- "config" (mirrors the hydra flags) -----------------------
NUM_ATOM = 8          # num_atom (beads)
HIDDEN = 32           # hidden width of config.models (a tanh MLP here)
IS_NORMALIZE = True
IS_ANGLE_PRIOR = True
IS_LENGTH_PRIOR = True
IS_DIHEDRAL_PRIOR = True
IS_CMAP = False       # TODO(synk): external CMAP(phi, psi) table energy not translated.

# Rows per grid step.  At F=17 / H=32 in f32 the live VMEM per step is well
# under 0.5 MiB (double-buffered), so this is safe on v7x's 64 MiB VMEM as
# well as v5e/v6e.
MAX_ROW_TILE = 1024


# ================================ Pallas kernels ================================
def _mlp_fwd_only_kernel(x_ref, w1_ref, b1_ref, w2_ref, b2_ref, w3_ref, b3_ref,
                         e_ref):
    """Energy net primal only: Linear -> tanh -> Linear -> tanh -> row-dot."""
    x = x_ref[...]
    h1 = jnp.tanh(jnp.dot(x, w1_ref[...], preferred_element_type=jnp.float32)
                  + b1_ref[...])
    h2 = jnp.tanh(jnp.dot(h1, w2_ref[...], preferred_element_type=jnp.float32)
                  + b2_ref[...])
    # Final (M,H)@(H,1) matmul replaced with a VPU/XLU reduction (W3 passed as
    # a (1,H) row) -- an N=1 matmul would waste the MXU output lanes.
    e_ref[...] = jnp.sum(h2 * w3_ref[...], axis=-1, keepdims=True) + b3_ref[...]


def _mlp_fused_kernel(x_ref, w1_ref, b1_ref, w2_ref, b2_ref, w3_ref, b3_ref,
                      w2t_ref, w1t_ref, e_ref, dx_ref):
    """Fused energy + input-gradient (unit cotangent per row).

    h1/h2 live only in vregs/VMEM within this body -- no HBM residuals and no
    second pallas_call launch for the backward chain."""
    x = x_ref[...]
    h1 = jnp.tanh(jnp.dot(x, w1_ref[...], preferred_element_type=jnp.float32)
                  + b1_ref[...])
    h2 = jnp.tanh(jnp.dot(h1, w2_ref[...], preferred_element_type=jnp.float32)
                  + b2_ref[...])
    w3 = w3_ref[...]                                          # (1, H) row
    e_ref[...] = jnp.sum(h2 * w3, axis=-1, keepdims=True) + b3_ref[...]
    # Backward chain with unit cotangent (de/dx per row).  The K=1 matmul
    # (g @ W3.T) becomes a broadcast multiply on the VPU; W2^T / W1^T are
    # pre-transposed on the host so no in-kernel transpose is needed.
    dz2 = w3 * (1.0 - h2 * h2)                                # (TM, H)
    dh1 = jnp.dot(dz2, w2t_ref[...], preferred_element_type=jnp.float32)
    dz1 = dh1 * (1.0 - h1 * h1)                               # (TM, H)
    dx_ref[...] = jnp.dot(dz1, w1t_ref[...], preferred_element_type=jnp.float32)


# =============================== pallas_call wrappers ===============================
def _choose_row_tile(m):
    """Pick a row tile (multiple of 8) and the padded row count."""
    m_pad = ((m + 7) // 8) * 8
    if m_pad <= MAX_ROW_TILE:
        return m_pad, m_pad
    tm = MAX_ROW_TILE
    m_pad = ((m + tm - 1) // tm) * tm
    return tm, m_pad


def _pad_rows(a, m_pad):
    m = a.shape[0]
    if m_pad == m:
        return a
    return jnp.pad(a, ((0, m_pad - m), (0, 0)))


def _full_spec(shape):
    # Whole-array block, constant index_map -> fetched once, stays VMEM-resident.
    return pl.BlockSpec(shape, lambda i: (0, 0))


def _compiler_params():
    return pltpu.CompilerParams(
        dimension_semantics=("parallel",),          # megacore sharding on v7x
        vmem_limit_bytes=32 * 1024 * 1024,          # explicit, v7x-safe budget
    )


def _mlp_forward_only(xf, W1, b1, W2, b2, W3, b3):
    m, f = xf.shape
    h = W1.shape[1]
    tm, m_pad = _choose_row_tile(m)
    xp = _pad_rows(xf, m_pad)
    w3row = W3.reshape(1, h)
    grid = (pl.cdiv(m_pad, tm),)
    row_in = pl.BlockSpec((tm, f), lambda i: (i, 0))
    e = pl.pallas_call(
        _mlp_fwd_only_kernel,
        out_shape=jax.ShapeDtypeStruct((m_pad, 1), jnp.float32),
        grid=grid,
        in_specs=[row_in,
                  _full_spec((f, h)), _full_spec((1, h)),
                  _full_spec((h, h)), _full_spec((1, h)),
                  _full_spec((1, h)), _full_spec((1, 1))],
        out_specs=pl.BlockSpec((tm, 1), lambda i: (i, 0)),
        compiler_params=_compiler_params(),
    )(xp, W1, b1, W2, b2, w3row, b3)
    return e[:m]


def _mlp_forward_and_inputgrad(xf, W1, b1, W2, b2, W3, b3):
    m, f = xf.shape
    h = W1.shape[1]
    tm, m_pad = _choose_row_tile(m)
    xp = _pad_rows(xf, m_pad)
    # Host-side (one-off, tiny) reshapes/transposes so the kernel never does them.
    w3row = W3.reshape(1, h)          # (H,1) column -> (1,H) row
    W2T = W2.T                        # (H,H)
    W1T = W1.T                        # (H,F)
    grid = (pl.cdiv(m_pad, tm),)
    row_in = pl.BlockSpec((tm, f), lambda i: (i, 0))
    e, dx = pl.pallas_call(
        _mlp_fused_kernel,
        out_shape=(jax.ShapeDtypeStruct((m_pad, 1), jnp.float32),
                   jax.ShapeDtypeStruct((m_pad, f), jnp.float32)),
        grid=grid,
        in_specs=[row_in,
                  _full_spec((f, h)), _full_spec((1, h)),
                  _full_spec((h, h)), _full_spec((1, h)),
                  _full_spec((1, h)), _full_spec((1, 1)),
                  _full_spec((h, h)), _full_spec((h, f))],
        out_specs=(pl.BlockSpec((tm, 1), lambda i: (i, 0)),
                   pl.BlockSpec((tm, f), lambda i: (i, 0))),
        compiler_params=_compiler_params(),
    )(xp, W1, b1, W2, b2, w3row, b3, W2T, W1T)
    return e[:m], dx[:m]


# ============================ custom_vjp energy wrapper ============================
@jax.custom_vjp
def mlp_energy(xf, W1, b1, W2, b2, W3, b3):
    # Primal-only path: never writes residuals / gradients to HBM.
    return _mlp_forward_only(xf, W1, b1, W2, b2, W3, b3)


def _mlp_energy_fwd(xf, W1, b1, W2, b2, W3, b3):
    # Under jax.grad: a single fused pallas_call produces both the energy and
    # the per-row input Jacobian d e / d xf (unit cotangent).
    e, dx_unit = _mlp_forward_and_inputgrad(xf, W1, b1, W2, b2, W3, b3)
    return e, (dx_unit, W1, b1, W2, b2, W3, b3)


def _mlp_energy_bwd(res, g):
    dx_unit, W1, b1, W2, b2, W3, b3 = res
    dx = g * dx_unit                              # (M,1) * (M,F) broadcast (VPU-cheap)
    # TODO(synk): parameter cotangents are zeros -- CGnet's force only
    # differentiates the energy w.r.t. the coordinates x, never the parameters.
    return (dx, jnp.zeros_like(W1), jnp.zeros_like(b1), jnp.zeros_like(W2),
            jnp.zeros_like(b2), jnp.zeros_like(W3), jnp.zeros_like(b3))


mlp_energy.defvjp(_mlp_energy_fwd, _mlp_energy_bwd)


# ====================== geometric feature layers (plain JAX) ======================
def _cal_length(x):
    """LengthLayer: consecutive bond lengths.  (B,T,N,3) -> (B,T,N-1)."""
    d = x[..., 1:, :] - x[..., :-1, :]
    return jnp.sqrt(jnp.sum(d * d, axis=-1) + 1e-12)


def _cal_angle(x):
    """AngleLayer: bond angles at interior atoms.  (B,T,N,3) -> (B,T,N-2)."""
    v1 = x[..., :-2, :] - x[..., 1:-1, :]
    v2 = x[..., 2:, :] - x[..., 1:-1, :]
    n1 = jnp.sqrt(jnp.sum(v1 * v1, axis=-1) + 1e-12)
    n2 = jnp.sqrt(jnp.sum(v2 * v2, axis=-1) + 1e-12)
    cos = jnp.sum(v1 * v2, axis=-1) / (n1 * n2)
    return jnp.arccos(jnp.clip(cos, -1.0 + 1e-6, 1.0 - 1e-6))


def _dihedral(p0, p1, p2, p3):
    b0 = p1 - p0
    b1 = p2 - p1
    b2 = p3 - p2
    n1 = jnp.cross(b0, b1)
    n2 = jnp.cross(b1, b2)
    b1u = b1 / jnp.sqrt(jnp.sum(b1 * b1, axis=-1, keepdims=True) + 1e-12)
    m1 = jnp.cross(n1, b1u)
    xx = jnp.sum(n1 * n2, axis=-1)
    yy = jnp.sum(m1 * n2, axis=-1)
    return jnp.arctan2(yy, xx)


def _cal_dihedral(x, num_atom):
    """DihedralLayer: (num_atom//4 - 1) (phi, psi) pairs -> 4 features each
    (cos/sin).  Returns (features, (phi, psi)) like the torch layer."""
    n_groups = num_atom // 4
    phis, psis = [], []
    for k in range(n_groups - 1):
        i = 4 * k + 1
        atom = lambda j: x[..., j, :]
        phis.append(_dihedral(atom(i), atom(i + 1), atom(i + 2), atom(i + 3)))
        psis.append(_dihedral(atom(i + 1), atom(i + 2), atom(i + 3), atom(i + 4)))
    phi = jnp.stack(phis, axis=-1)
    psi = jnp.stack(psis, axis=-1)
    feat = jnp.concatenate(
        [jnp.cos(phi), jnp.sin(phi), jnp.cos(psi), jnp.sin(psi)], axis=-1)
    return feat, (phi, psi)


def _prior_energy(feat, k, mean):
    """PriorEnergyLayer: harmonic prior sum_j k_j (f_j - mean_j)^2 -> (..., 1)."""
    d = feat - mean
    return jnp.sum(k * d * d, axis=-1, keepdims=True)


# ================================ parameter init ================================
def input_dim_from_num_atom(num_atom):
    return (num_atom - 1) + (num_atom - 2) + (num_atom // 4 - 1) * 4


def init_params(key, num_atom, hidden):
    F = input_dim_from_num_atom(num_atom)
    n_len, n_ang, n_dih = num_atom - 1, num_atom - 2, (num_atom // 4 - 1) * 4
    ks = jax.random.split(key, 12)
    p = {}
    # energy MLP (config.models): Linear(F,H) -> tanh -> Linear(H,H) -> tanh -> Linear(H,1)
    p["W1"] = 0.1 * jax.random.normal(ks[0], (F, hidden), jnp.float32)
    p["b1"] = jnp.zeros((1, hidden), jnp.float32)
    p["W2"] = 0.1 * jax.random.normal(ks[1], (hidden, hidden), jnp.float32)
    p["b2"] = jnp.zeros((1, hidden), jnp.float32)
    p["W3"] = 0.1 * jax.random.normal(ks[2], (hidden, 1), jnp.float32)
    p["b3"] = jnp.zeros((1, 1), jnp.float32)
    # z-score statistics (angle_mean/std, length_mean/std, dihedral_mean/std)
    p["angle_mean"] = 1.9 + 0.1 * jax.random.normal(ks[3], (n_ang,), jnp.float32)
    p["angle_std"] = 0.5 + 0.1 * jnp.abs(jax.random.normal(ks[4], (n_ang,), jnp.float32))
    p["length_mean"] = 1.4 + 0.1 * jax.random.normal(ks[5], (n_len,), jnp.float32)
    p["length_std"] = 0.5 + 0.1 * jnp.abs(jax.random.normal(ks[6], (n_len,), jnp.float32))
    p["dihedral_mean"] = 0.1 * jax.random.normal(ks[7], (n_dih,), jnp.float32)
    p["dihedral_std"] = 0.5 + 0.1 * jnp.abs(jax.random.normal(ks[8], (n_dih,), jnp.float32))
    # prior stiffness parameters
    p["angle_k"] = 0.1 + 0.1 * jnp.abs(jax.random.normal(ks[9], (n_ang,), jnp.float32))
    p["length_k"] = 0.1 + 0.1 * jnp.abs(jax.random.normal(ks[10], (n_len,), jnp.float32))
    p["dihedral_k"] = 0.1 + 0.1 * jnp.abs(jax.random.normal(ks[11], (n_dih,), jnp.float32))
    # force de-standardization buffers (register_buffer('std'/'mean'))
    p["forces_std"] = jnp.float32(1.5)
    p["forces_mean"] = jnp.float32(0.1)
    return p


# ================================= CGnet forward =================================
def cgnet_forward(params, x, num_atom=NUM_ATOM, is_use_NN=True):
    """Returns (force, energy) exactly as CGnet.forward.

    x: (B, T, N, 3) float32.  energy: (B, T, 1).  force: (B, T, N, 3)."""

    def energy_fn(xx):
        angle = _cal_angle(xx)                                  # (B,T,N-2)
        length = _cal_length(xx)                                # (B,T,N-1)
        dihedral, _dihedral_rad = _cal_dihedral(xx, num_atom)   # (B,T,4*(N//4-1))
        if IS_NORMALIZE:
            angle = (angle - params["angle_mean"]) / params["angle_std"]
            length = (length - params["length_mean"]) / params["length_std"]
            dihedral = (dihedral - params["dihedral_mean"]) / params["dihedral_std"]
        energy = None
        if is_use_NN:
            net_in = jnp.concatenate([angle, length, dihedral], axis=-1)
            lead = net_in.shape[:-1]
            flat = net_in.reshape((-1, net_in.shape[-1])).astype(jnp.float32)
            e = mlp_energy(flat, params["W1"], params["b1"], params["W2"],
                           params["b2"], params["W3"], params["b3"])
            energy = e.reshape(lead + (1,))
        if IS_ANGLE_PRIOR:
            ap = _prior_energy(angle, params["angle_k"], params["angle_mean"])
            energy = ap if energy is None else energy + ap
        if IS_LENGTH_PRIOR:
            energy = energy + _prior_energy(length, params["length_k"],
                                            params["length_mean"])
        if IS_DIHEDRAL_PRIOR:
            energy = energy + _prior_energy(dihedral, params["dihedral_k"],
                                            params["dihedral_mean"])
        # TODO(synk): if IS_CMAP: energy += cmap(phi, psi) (external module) skipped.
        return energy

    def neg_total(xx):
        e = energy_fn(xx)
        return -jnp.sum(e), e

    # torch.autograd.grad(-torch.sum(energy), x)
    force, energy = jax.grad(neg_total, has_aux=True)(x)
    force = params["forces_std"] * force + params["forces_mean"]
    return force, energy


# ===================================== main =====================================
if __name__ == "__main__":
    key = jax.random.PRNGKey(0)
    kx, kp = jax.random.split(key)

    B, T = 2, 8
    x = jax.random.normal(kx, (B, T, NUM_ATOM, 3), jnp.float32)
    params = init_params(kp, NUM_ATOM, HIDDEN)

    fwd = jax.jit(functools.partial(cgnet_forward, num_atom=NUM_ATOM, is_use_NN=True))
    force, energy = fwd(params, x)
    jax.block_until_ready((force, energy))

    assert force.shape == (B, T, NUM_ATOM, 3), force.shape
    assert energy.shape == (B, T, 1), energy.shape
    assert jnp.all(jnp.isfinite(force)) and jnp.all(jnp.isfinite(energy))
    print("KERNEL_OK")
</pallas_src>

<mosaic_0001>
module attributes {stable_mosaic.version = 11 : i64} {
  func.func @_mlp_fused_kernel(%arg0: i32, %arg1: memref<16x17xf32, #tpu.memory_space<vmem>>, %arg2: memref<17x32xf32, #tpu.memory_space<vmem>>, %arg3: memref<1x32xf32, #tpu.memory_space<vmem>>, %arg4: memref<32x32xf32, #tpu.memory_space<vmem>>, %arg5: memref<1x32xf32, #tpu.memory_space<vmem>>, %arg6: memref<1x32xf32, #tpu.memory_space<vmem>>, %arg7: memref<1x1xf32, #tpu.memory_space<vmem>>, %arg8: memref<32x32xf32, #tpu.memory_space<vmem>>, %arg9: memref<32x17xf32, #tpu.memory_space<vmem>>, %arg10: memref<16x1xf32, #tpu.memory_space<vmem>>, %arg11: memref<16x17xf32, #tpu.memory_space<vmem>>) attributes {dimension_semantics = [#tpu.dimension_semantics<parallel>], iteration_bounds = array<i64: 1>, scalar_prefetch = 0 : i64, scratch_operands = 0 : i64, tpu.core_type = #tpu.core_type<tc>, window_params = [{transform_indices = @transform_0, window_bounds = array<i64: 16, 17>}, {pipeline_mode = #tpu.pipeline_mode<synchronous>, transform_indices = @transform_1, window_bounds = array<i64: 17, 32>}, {pipeline_mode = #tpu.pipeline_mode<synchronous>, transform_indices = @transform_2, window_bounds = array<i64: 1, 32>}, {pipeline_mode = #tpu.pipeline_mode<synchronous>, transform_indices = @transform_3, window_bounds = array<i64: 32, 32>}, {pipeline_mode = #tpu.pipeline_mode<synchronous>, transform_indices = @transform_4, window_bounds = array<i64: 1, 32>}, {pipeline_mode = #tpu.pipeline_mode<synchronous>, transform_indices = @transform_5, window_bounds = array<i64: 1, 32>}, {pipeline_mode = #tpu.pipeline_mode<synchronous>, transform_indices = @transform_6, window_bounds = array<i64: 1, 1>}, {pipeline_mode = #tpu.pipeline_mode<synchronous>, transform_indices = @transform_7, window_bounds = array<i64: 32, 32>}, {pipeline_mode = #tpu.pipeline_mode<synchronous>, transform_indices = @transform_8, window_bounds = array<i64: 32, 17>}, {transform_indices = @transform_9, window_bounds = array<i64: 16, 1>}, {transform_indices = @transform_10, window_bounds = array<i64: 16, 17>}]} {
    %c0 = arith.constant 0 : index
    %c0_0 = arith.constant 0 : index
    %0 = vector.load %arg1[%c0, %c0_0] : memref<16x17xf32, #tpu.memory_space<vmem>>, vector<16x17xf32>
    %c0_1 = arith.constant 0 : index
    %c0_2 = arith.constant 0 : index
    %1 = vector.load %arg2[%c0_1, %c0_2] : memref<17x32xf32, #tpu.memory_space<vmem>>, vector<17x32xf32>
    %cst = arith.constant dense<0.000000e+00> : vector<16x32xf32>
    %2 = tpu.matmul %0, %1, %cst {dimension_numbers = #tpu.dot_dimension_numbers<[1], [0], [0], [1], [0, 0, 1, 1], [], []>} : vector<16x17xf32>, vector<17x32xf32>, vector<16x32xf32> -> vector<16x32xf32>
    %c0_3 = arith.constant 0 : index
    %c0_4 = arith.constant 0 : index
    %3 = vector.load %arg3[%c0_3, %c0_4] : memref<1x32xf32, #tpu.memory_space<vmem>>, vector<1x32xf32>
    %4 = vector.broadcast %3 : vector<1x32xf32> to vector<16x32xf32>
    %5 = arith.addf %2, %4 : vector<16x32xf32>
    %6 = math.tanh %5 : vector<16x32xf32>
    %c0_5 = arith.constant 0 : index
    %c0_6 = arith.constant 0 : index
    %7 = vector.load %arg4[%c0_5, %c0_6] : memref<32x32xf32, #tpu.memory_space<vmem>>, vector<32x32xf32>
    %cst_7 = arith.constant dense<0.000000e+00> : vector<16x32xf32>
    %8 = tpu.matmul %6, %7, %cst_7 {dimension_numbers = #tpu.dot_dimension_numbers<[1], [0], [0], [1], [0, 0, 1, 1], [], []>} : vector<16x32xf32>, vector<32x32xf32>, vector<16x32xf32> -> vector<16x32xf32>
    %c0_8 = arith.constant 0 : index
    %c0_9 = arith.constant 0 : index
    %9 = vector.load %arg5[%c0_8, %c0_9] : memref<1x32xf32, #tpu.memory_space<vmem>>, vector<1x32xf32>
    %10 = vector.broadcast %9 : vector<1x32xf32> to vector<16x32xf32>
    %11 = arith.addf %8, %10 : vector<16x32xf32>
    %12 = math.tanh %11 : vector<16x32xf32>
    %c0_10 = arith.constant 0 : index
    %c0_11 = arith.constant 0 : index
    %13 = vector.load %arg6[%c0_10, %c0_11] : memref<1x32xf32, #tpu.memory_space<vmem>>, vector<1x32xf32>
    %14 = vector.broadcast %13 : vector<1x32xf32> to vector<16x32xf32>
    %15 = arith.mulf %12, %14 : vector<16x32xf32>
    %cst_12 = arith.constant dense<0.000000e+00> : vector<16xf32>
    %16 = vector.multi_reduction <add>, %15, %cst_12 [1] : vector<16x32xf32> to vector<16xf32>
    %17 = vector.shape_cast %16 : vector<16xf32> to vector<16x1xf32>
    %c0_13 = arith.constant 0 : index
    %c0_14 = arith.constant 0 : index
    %18 = vector.load %arg7[%c0_13, %c0_14] : memref<1x1xf32, #tpu.memory_space<vmem>>, vector<1x1xf32>
    %19 = vector.broadcast %18 : vector<1x1xf32> to vector<16x1xf32>
    %20 = arith.addf %17, %19 : vector<16x1xf32>
    %c0_15 = arith.constant 0 : index
    %c0_16 = arith.constant 0 : index
    %21 = vector.load %arg10[%c0_15, %c0_16] : memref<16x1xf32, #tpu.memory_space<vmem>>, vector<16x1xf32>
    tpu.vector_store %arg10[%c0_15, %c0_16], %20 {strides = array<i32>} : memref<16x1xf32, #tpu.memory_space<vmem>>, vector<16x1xf32>,
    %22 = arith.mulf %12, %12 : vector<16x32xf32>
    %cst_17 = arith.constant 1.000000e+00 : f32
    %23 = vector.broadcast %cst_17 : f32 to vector<16x32xf32>
    %24 = arith.subf %23, %22 : vector<16x32xf32>
    %25 = vector.broadcast %13 : vector<1x32xf32> to vector<16x32xf32>
    %26 = arith.mulf %25, %24 : vector<16x32xf32>
    %c0_18 = arith.constant 0 : index
    %c0_19 = arith.constant 0 : index
    %27 = vector.load %arg8[%c0_18, %c0_19] : memref<32x32xf32, #tpu.memory_space<vmem>>, vector<32x32xf32>
    %cst_20 = arith.constant dense<0.000000e+00> : vector<16x32xf32>
    %28 = tpu.matmul %26, %27, %cst_20 {dimension_numbers = #tpu.dot_dimension_numbers<[1], [0], [0], [1], [0, 0, 1, 1], [], []>} : vector<16x32xf32>, vector<32x32xf32>, vector<16x32xf32> -> vector<16x32xf32>
    %29 = arith.mulf %6, %6 : vector<16x32xf32>
    %cst_21 = arith.constant 1.000000e+00 : f32
    %30 = vector.broadcast %cst_21 : f32 to vector<16x32xf32>
    %31 = arith.subf %30, %29 : vector<16x32xf32>
    %32 = arith.mulf %28, %31 : vector<16x32xf32>
    %c0_22 = arith.constant 0 : index
    %c0_23 = arith.constant 0 : index
    %33 = vector.load %arg9[%c0_22, %c0_23] : memref<32x17xf32, #tpu.memory_space<vmem>>, vector<32x17xf32>
    %cst_24 = arith.constant dense<0.000000e+00> : vector<16x17xf32>
    %34 = tpu.matmul %32, %33, %cst_24 {dimension_numbers = #tpu.dot_dimension_numbers<[1], [0], [0], [1], [0, 0, 1, 1], [], []>} : vector<16x32xf32>, vector<32x17xf32>, vector<16x17xf32> -> vector<16x17xf32>
    %c0_25 = arith.constant 0 : index
    %c0_26 = arith.constant 0 : index
    %35 = vector.load %arg11[%c0_25, %c0_26] : memref<16x17xf32, #tpu.memory_space<vmem>>, vector<16x17xf32>
    tpu.vector_store %arg11[%c0_25, %c0_26], %34 {strides = array<i32>} : memref<16x17xf32, #tpu.memory_space<vmem>>, vector<16x17xf32>,
    return
  }
  func.func @transform_0(%arg0: i32) -> (i32, i32) {
    %c0_i32 = arith.constant 0 : i32
    %c0_i32_0 = arith.constant 0 : i32
    return %arg0, %c0_i32 : i32, i32
  }
  func.func @transform_1(%arg0: i32) -> (i32, i32) {
    %c0_i32 = arith.constant 0 : i32
    %c0_i32_0 = arith.constant 0 : i32
    %c0_i32_1 = arith.constant 0 : i32
    return %c0_i32, %c0_i32_0 : i32, i32
  }
  func.func @transform_2(%arg0: i32) -> (i32, i32) {
    %c0_i32 = arith.constant 0 : i32
    %c0_i32_0 = arith.constant 0 : i32
    %c0_i32_1 = arith.constant 0 : i32
    return %c0_i32, %c0_i32_0 : i32, i32
  }
  func.func @transform_3(%arg0: i32) -> (i32, i32) {
    %c0_i32 = arith.constant 0 : i32
    %c0_i32_0 = arith.constant 0 : i32
    %c0_i32_1 = arith.constant 0 : i32
    return %c0_i32, %c0_i32_0 : i32, i32
  }
  func.func @transform_4(%arg0: i32) -> (i32, i32) {
    %c0_i32 = arith.constant 0 : i32
    %c0_i32_0 = arith.constant 0 : i32
    %c0_i32_1 = arith.constant 0 : i32
    return %c0_i32, %c0_i32_0 : i32, i32
  }
  func.func @transform_5(%arg0: i32) -> (i32, i32) {
    %c0_i32 = arith.constant 0 : i32
    %c0_i32_0 = arith.constant 0 : i32
    %c0_i32_1 = arith.constant 0 : i32
    return %c0_i32, %c0_i32_0 : i32, i32
  }
  func.func @transform_6(%arg0: i32) -> (i32, i32) {
    %c0_i32 = arith.constant 0 : i32
    %c0_i32_0 = arith.constant 0 : i32
    %c0_i32_1 = arith.constant 0 : i32
    return %c0_i32, %c0_i32_0 : i32, i32
  }
  func.func @transform_7(%arg0: i32) -> (i32, i32) {
    %c0_i32 = arith.constant 0 : i32
    %c0_i32_0 = arith.constant 0 : i32
    %c0_i32_1 = arith.constant 0 : i32
    return %c0_i32, %c0_i32_0 : i32, i32
  }
  func.func @transform_8(%arg0: i32) -> (i32, i32) {
    %c0_i32 = arith.constant 0 : i32
    %c0_i32_0 = arith.constant 0 : i32
    %c0_i32_1 = arith.constant 0 : i32
    return %c0_i32, %c0_i32_0 : i32, i32
  }
  func.func @transform_9(%arg0: i32) -> (i32, i32) {
    %c0_i32 = arith.constant 0 : i32
    %c0_i32_0 = arith.constant 0 : i32
    return %arg0, %c0_i32 : i32, i32
  }
  func.func @transform_10(%arg0: i32) -> (i32, i32) {
    %c0_i32 = arith.constant 0 : i32
    %c0_i32_0 = arith.constant 0 : i32
    return %arg0, %c0_i32 : i32, i32
  }
}

</mosaic_0001>

<llo_original>
// kernel: split.43
$region0: #{split.43}
  #allocation0 [shape = 'u32[2048]{0}', space=vmem, size = 0x2000, scoped, tag = 'scoped memory for split.43']
  #allocation1 [shape = 'u32[2048]{0}', space=vmem, size = 0x2000, scoped, tag = 'scoped memory for split.43']
  #allocation2 [shape = 'u32[2048]{0}', space=vmem, size = 0x2000, scoped, tag = 'scoped memory for split.43']
  #allocation3 [shape = 'u32[2048]{0}', space=vmem, size = 0x2000, scoped, tag = 'scoped memory for split.43']
  #allocation4 [shape = 'u32[2048]{0}', space=vmem, size = 0x2000, scoped, tag = 'scoped memory for split.43']
  #allocation5 [shape = 's32[1]{0}', space=sflag, size = 0x4, scoped, tag = 'scoped memory for split.43']
  %s0 = inlined_call_operand.vmem [shape: f32[2,8,17], index: 0, kind: input, shape index: {}]
  %s1 = inlined_call_operand.vmem [shape: f32[2,8,4], index: 1, kind: output, shape index: {}]
  %v2 = vld [vmem:[%s0] sm:$0xff]
  %v3 = vlaneseq
  %v4 = vand.u32 %v3, 127
  %vm5 = vcmp.lt.s32.totalorder %v4, 13
  %v6 = vsel %vm5, 0, %v2
  %7 = vrot.lane.b32.xlu0 %v6, 115
  %v8 = vpop.permute.xlu0 %7
  %9 = vst [vmem:[%s1] sm:$0xff] %v8
  %s10 = scalar_lea.vmem %s0, 8
  %v11 = vld [vmem:[%s10] sm:$0xff]
  %v12 = vlaneseq
  %v13 = vand.u32 %v12, 127
  %vm14 = vcmp.lt.s32.totalorder %v13, 13
  %v15 = vsel %vm14, 0, %v11
  %16 = vrot.lane.b32.xlu0 %v15, 115
  %v17 = vpop.permute.xlu0 %16
  %s18 = scalar_lea.vmem %s1, 8
  %19 = vst [vmem:[%s18] sm:$0xff] %v17

// kernel: split.66
$region0: #{split.66}
  #allocation0 [shape = 'u32[2048]{0}', space=vmem, size = 0x2000, scoped, tag = 'scoped memory for split.66']
  #allocation1 [shape = 'u32[2048]{0}', space=vmem, size = 0x2000, scoped, tag = 'scoped memory for split.66']
  #allocation2 [shape = 'u32[2048]{0}', space=vmem, size = 0x2000, scoped, tag = 'scoped memory for split.66']
  #allocation3 [shape = 'u32[2048]{0}', space=vmem, size = 0x2000, scoped, tag = 'scoped memory for split.66']
  #allocation4 [shape = 'u32[2048]{0}', space=vmem, size = 0x2000, scoped, tag = 'scoped memory for split.66']
  #allocation5 [shape = 's32[1]{0}', space=sflag, size = 0x4, scoped, tag = 'scoped memory for split.66']
  %s0 = inlined_call_operand.vmem [shape: f32[2,8,17], index: 0, kind: input, shape index: {}]
  %s1 = inlined_call_operand.vmem [shape: f32[2,8,7], index: 1, kind: output, shape index: {}]
  %v2 = vld [vmem:[%s0] sm:$0xff]
  %v3 = vlaneseq
  %v4 = vand.u32 %v3, 127
  %vm5 = vcmp.lt.s32.totalorder %v4, 6
  %v6 = vsel %vm5, 0, %v2
  %7 = vrot.lane.b32.xlu0 %v6, 122
  %v8 = vpop.permute.xlu0 %7
  %9 = vst [vmem:[%s1] sm:$0xff] %v8
  %s10 = scalar_lea.vmem %s0, 8
  %v11 = vld [vmem:[%s10] sm:$0xff]
  %v12 = vlaneseq
  %v13 = vand.u32 %v12, 127
  %vm14 = vcmp.lt.s32.totalorder %v13, 6
  %v15 = vsel %vm14, 0, %v11
  %16 = vrot.lane.b32.xlu0 %v15, 122
  %v17 = vpop.permute.xlu0 %16
  %s18 = scalar_lea.vmem %s1, 8
  %19 = vst [vmem:[%s18] sm:$0xff] %v17

// kernel: jvp__.1
$region0: #{jvp__.1}
  #allocation0 [shape = 'u32[]', space=smem, size = 0x4, offset = 0x4, fixed_abs, tag = 'smem constant byte address 0x4 - core index']
  #allocation1 [shape = 'u32[144,128]{1,0:T(1,128)}', space=vmem, size = 0x12000, scoped, tag = 'internal scratch']
  #allocation2 [shape = 'f32[1,1]{1,0:T(1,128)S(1)}', space=vmem, size = 0x200, scoped, tag = 'scoped memory for jvp__.1']
  %s0 = inlined_call_operand.vmem [shape: f32[16,17], index: 0, kind: input, shape index: {}]
  %s1 = inlined_call_operand.vmem [shape: f32[17,32], index: 1, kind: input, shape index: {}]
  %s2 = inlined_call_operand.vmem [shape: f32[1,32], index: 2, kind: input, shape index: {}]
  %s3 = inlined_call_operand.vmem [shape: f32[32,32], index: 3, kind: input, shape index: {}]
  %s4 = inlined_call_operand.vmem [shape: f32[1,32], index: 4, kind: input, shape index: {}]
  %s5 = inlined_call_operand.vmem [shape: f32[1,32], index: 5, kind: input, shape index: {}]
  %s6 = inlined_call_operand.<no memory space> [shape: f32[1,1], index: 6, kind: input, shape index: {}]
  %s7 = inlined_call_operand.vmem [shape: f32[32,32], index: 7, kind: input, shape index: {}]
  %s8 = inlined_call_operand.vmem [shape: f32[32,17], index: 8, kind: input, shape index: {}]
  %s9 = inlined_call_operand.vmem [shape: f32[16,1], index: 9, kind: output, shape index: {0}]
  %s10 = inlined_call_operand.vmem [shape: f32[16,17], index: 10, kind: output, shape index: {1}]
  %11 = xla_tuple %s9, %s10
  %s12 = sld [smem:[#allocation0]]
  $region54: #{jvp__.1} parent=0
    _
  %s14 = ssub.s32 1, %s12
  %s15 = scalar_select 0, %s14, %s12
  %v16 = vstv %s6
  %17 = vst [vmem:[#allocation2] sm:$0x1] %v16
  // Predicated region
  $region2: #{jvp__.1} parent=0 // pred_check
    _
  $region3: #{jvp__.1} parent=0 // pred_check_branch
    %19 = sbr.rel (0) target = $region5
  $region4: #{jvp__.1} parent=0 // pred_region
    _
  $region5: #{jvp__.1} parent=0 // pred_fallthru
    _
  // Predicated region
  $region6: #{jvp__.1} parent=0 // pred_check
    _
  $region7: #{jvp__.1} parent=0 // pred_check_branch
    %21 = sbr.rel (0) target = $region9
  $region8: #{jvp__.1} parent=0 // pred_region
    _
  $region9: #{jvp__.1} parent=0 // pred_fallthru
    _
  // Predicated region
  $region10: #{jvp__.1} parent=0 // pred_check
    _
  $region11: #{jvp__.1} parent=0 // pred_check_branch
    %23 = sbr.rel (0) target = $region13
  $region12: #{jvp__.1} parent=0 // pred_region
    _
  $region13: #{jvp__.1} parent=0 // pred_fallthru
    _
  // Predicated region
  $region14: #{jvp__.1} parent=0 // pred_check
    _
  $region15: #{jvp__.1} parent=0 // pred_check_branch
    %25 = sbr.rel (0) target = $region17
  $region16: #{jvp__.1} parent=0 // pred_region
    _
  $region17: #{jvp__.1} parent=0 // pred_fallthru
    _
  // Predicated region
  $region18: #{jvp__.1} parent=0 // pred_check
    _
  $region19: #{jvp__.1} parent=0 // pred_check_branch
    %27 = sbr.rel (0) target = $region21
  $region20: #{jvp__.1} parent=0 // pred_region
    _
  $region21: #{jvp__.1} parent=0 // pred_fallthru
    _
  // Predicated region
  $region22: #{jvp__.1} parent=0 // pred_check
    _
  $region23: #{jvp__.1} parent=0 // pred_check_branch
    %29 = sbr.rel (0) target = $region25
  $region24: #{jvp__.1} parent=0 // pred_region
    _
  $region25: #{jvp__.1} parent=0 // pred_fallthru
    _
  // Predicated region
  $region26: #{jvp__.1} parent=0 // pred_check
    _
  $region27: #{jvp__.1} parent=0 // pred_check_branch
    %31 = sbr.rel (0) target = $region29
  $region28: #{jvp__.1} parent=0 // pred_region
    _
  $region29: #{jvp__.1} parent=0 // pred_fallthru
    _
  // Predicated region
  $region30: #{jvp__.1} parent=0 // pred_check
    _
  $region31: #{jvp__.1} parent=0 // pred_check_branch
    %33 = sbr.rel (0) target = $region33
  $region32: #{jvp__.1} parent=0 // pred_region
    _
  $region33: #{jvp__.1} parent=0 // pred_fallthru
    _
  // Predicated region
  $region34: #{jvp__.1} parent=0 // pred_check
    _
  $region35: #{jvp__.1} parent=0 // pred_check_branch
    %35 = sbr.rel (0) target = $region37
  $region36: #{jvp__.1} parent=0 // pred_region
    _
  $region37: #{jvp__.1} parent=0 // pred_fallthru
    _
  %v36 = vld [vmem:[%s0] sm:$0xff]
  %v37 = vld [vmem:[%s0 + $0x8] sm:$0xff]
  %v38 = vld [vmem:[%s1] sm:$0xff]
  %v39 = vld [vmem:[%s1 + $0x8] sm:$0xff]
  %v40 = vld [vmem:[%s1 + $0x10] sm:$0x1]
  %v41 = vld [vmem:[%s2] sm:$0x1]
  %v43 = vlaneseq
  %v44 = vshrl.u32 %v43, 7
  %v45 = vsub.s32 0, %v44
  %v46 = vrot.slane %v41, %v45
  %vm48 = vcmask 138240
  %v50 = vsel %vm48, %v36, 0
  %v53 = vsel %vm48, %v37, 0
  %vm55 = vcmask 1040384
  %v57 = vsel %vm55, %v40, 0
  %59 = vmatprep.subr.mxu0 0.0
  %60 = vmatpush1.msra.mxu0 %v38
  %61 = vmatprep.subr.mxu0 0.0
  %62 = vmatpush1.msra.mxu0 %v39
  %63 = vmatprep.subr.mxu0 0.0
  %64 = vmatpush1.msra.mxu0 %v57
  %65 = vmatprep.subr.mxu0 0.0
  %66 = vmatpush1.msra.mxu0 0.0
  %67 = vmatprep.subr.mxu0 0.0
  %68 = vmatpush1.msra.mxu0 0.0
  %69 = vmatprep.subr.mxu0 0.0
  %70 = vmatpush1.msra.mxu0 0.0
  %71 = vmatprep.subr.mxu0 0.0
  %72 = vmatpush1.msra.mxu0 0.0
  %73 = vmatprep.subr.mxu0 0.0
  %74 = vmatpush1.msra.mxu0 0.0
  %75 = vmatprep.subr.mxu0 0.0
  %76 = vmatpush1.msra.mxu0 0.0
  %77 = vmatprep.subr.mxu0 0.0
  %78 = vmatpush1.msra.mxu0 0.0
  %79 = vmatprep.subr.mxu0 0.0
  %80 = vmatpush1.msra.mxu0 0.0
  %81 = vmatprep.subr.mxu0 0.0
  %82 = vmatpush1.msra.mxu0 0.0
  %83 = vmatprep.subr.mxu0 0.0
  %84 = vmatpush1.msra.mxu0 0.0
  %85 = vmatprep.subr.mxu0 0.0
  %86 = vmatpush1.msra.mxu0 0.0
  %87 = vmatprep.subr.mxu0 0.0
  %88 = vmatpush1.msra.mxu0 0.0
  %89 = vmatprep.subr.mxu0 0.0
  %90 = vmatpush1.msra.mxu0 0.0
  %91 = vmatprep.subr.mxu0 0.0
  %92 = vmatpush1.msra.mxu0 0.0
  %93 = vmatprep.subr.mxu0 0.0
  %94 = vmatpush1.msra.mxu0 0.0
  %95 = vmatprep.subr.mxu0 0.0
  %96 = vmatpush1.msra.mxu0 0.0
  %97 = vmatprep.subr.mxu0 0.0
  %98 = vmatpush1.msra.mxu0 0.0
  %99 = vmatprep.subr.mxu0 0.0
  %100 = vmatpush1.msra.mxu0 0.0
  %101 = vmatprep.subr.mxu0 0.0
  %102 = vmatpush1.msra.mxu0 0.0
  %103 = vmatprep.subr.mxu0 0.0
  %104 = vmatpush1.msra.mxu0 0.0
  %105 = vmatprep.subr.mxu0 0.0
  %106 = vmatpush1.msra.mxu0 0.0
  %107 = vmatprep.subr.mxu0 0.0
  %108 = vmatpush1.msra.mxu0 0.0
  %109 = vmatprep.subr.mxu0 0.0
  %110 = vmatpush1.msra.mxu0 0.0
  %111 = vmatprep.subr.mxu0 0.0
  %112 = vmatpush1.msra.mxu0 0.0
  %113 = vmatprep.subr.mxu0 0.0
  %114 = vmatpush1.msra.mxu0 0.0
  %115 = vmatprep.subr.mxu0 0.0
  %116 = vmatpush1.msra.mxu0 0.0
  %117 = vmatprep.subr.mxu0 0.0
  %118 = vmatpush1.msra.mxu0 0.0
  %119 = vmatprep.subr.mxu0 0.0
  %120 = vmatpush1.msra.mxu0 0.0
  %121 = vmatprep.subr.mxu0 0.0
  %122 = vmatpush1.msra.mxu0 0.0
  %123 = vmatprep.mubr.f32.mxu0 0.0
  %124 = vmatmul.mubr.f32.gmra.mrb[0].mxu0 %v50
  %v125 = vpop.f32.mrb[0].mxu0
  %v126 = vadd.f32 %v46, %v125
  %v127 = vpop.f32.mrb[0].mxu0
  %128 = vmatprep.mubr.f32.mxu0 0.0
  %129 = vmatmul.mubr.f32.gmra.mrb[0].mxu0 %v53
  %v130 = vpop.f32.mrb[0].mxu0
  %v131 = vadd.f32 %v46, %v130
  %v132 = vpop.f32.mrb[0].mxu0
  %133 = vdwg.mxu0
  %v134 = vtanh.pop %v126
  %v135 = vtanh.pop %v131
  %v136 = vld [vmem:[%s3] sm:$0xff]
  %v137 = vld [vmem:[%s3 + $0x8] sm:$0xff]
  %v138 = vld [vmem:[%s3 + $0x10] sm:$0xff]
  %v139 = vld [vmem:[%s3 + $0x18] sm:$0xff]
  %v140 = vld [vmem:[%s4] sm:$0x1]
  %v142 = vlaneseq
  %v143 = vshrl.u32 %v142, 7
  %v144 = vsub.s32 0, %v143
  %v145 = vrot.slane %v140, %v144
  %vm147 = vcmask 261120
  %v149 = vsel %vm147, %v134, 0
  %v152 = vsel %vm147, %v135, 0
  %154 = vmatprep.subr.mxu0 0.0
  %155 = vmatpush1.msra.mxu0 %v136
  %156 = vmatprep.subr.mxu0 0.0
  %157 = vmatpush1.msra.mxu0 %v137
  %158 = vmatprep.subr.mxu0 0.0
  %159 = vmatpush1.msra.mxu0 %v138
  %160 = vmatprep.subr.mxu0 0.0
  %161 = vmatpush1.msra.mxu0 %v139
  %162 = vmatprep.subr.mxu0 0.0
  %163 = vmatpush1.msra.mxu0 0.0
  %164 = vmatprep.subr.mxu0 0.0
  %165 = vmatpush1.msra.mxu0 0.0
  %166 = vmatprep.subr.mxu0 0.0
  %167 = vmatpush1.msra.mxu0 0.0
  %168 = vmatprep.subr.mxu0 0.0
  %169 = vmatpush1.msra.mxu0 0.0
  %170 = vmatprep.subr.mxu0 0.0
  %171 = vmatpush1.msra.mxu0 0.0
  %172 = vmatprep.subr.mxu0 0.0
  %173 = vmatpush1.msra.mxu0 0.0
  %174 = vmatprep.subr.mxu0 0.0
  %175 = vmatpush1.msra.mxu0 0.0
  %176 = vmatprep.subr.mxu0 0.0
  %177 = vmatpush1.msra.mxu0 0.0
  %178 = vmatprep.subr.mxu0 0.0
  %179 = vmatpush1.msra.mxu0 0.0
  %180 = vmatprep.subr.mxu0 0.0
  %181 = vmatpush1.msra.mxu0 0.0
  %182 = vmatprep.subr.mxu0 0.0
  %183 = vmatpush1.msra.mxu0 0.0
  %184 = vmatprep.subr.mxu0 0.0
  %185 = vmatpush1.msra.mxu0 0.0
  %186 = vmatprep.subr.mxu0 0.0
  %187 = vmatpush1.msra.mxu0 0.0
  %188 = vmatprep.subr.mxu0 0.0
  %189 = vmatpush1.msra.mxu0 0.0
  %190 = vmatprep.subr.mxu0 0.0
  %191 = vmatpush1.msra.mxu0 0.0
  %192 = vmatprep.subr.mxu0 0.0
  %193 = vmatpush1.msra.mxu0 0.0
  %194 = vmatprep.subr.mxu0 0.0
  %195 = vmatpush1.msra.mxu0 0.0
  %196 = vmatprep.subr.mxu0 0.0
  %197 = vmatpush1.msra.mxu0 0.0
  %198 = vmatprep.subr.mxu0 0.0
  %199 = vmatpush1.msra.mxu0 0.0
  %200 = vmatprep.subr.mxu0 0.0
  %201 = vmatpush1.msra.mxu0 0.0
  %202 = vmatprep.subr.mxu0 0.0
  %203 = vmatpush1.msra.mxu0 0.0
  %204 = vmatprep.subr.mxu0 0.0
  %205 = vmatpush1.msra.mxu0 0.0
  %206 = vmatprep.subr.mxu0 0.0
  %207 = vmatpush1.msra.mxu0 0.0
  %208 = vmatprep.subr.mxu0 0.0
  %209 = vmatpush1.msra.mxu0 0.0
  %210 = vmatprep.subr.mxu0 0.0
  %211 = vmatpush1.msra.mxu0 0.0
  %212 = vmatprep.subr.mxu0 0.0
  %213 = vmatpush1.msra.mxu0 0.0
  %214 = vmatprep.subr.mxu0 0.0
  %215 = vmatpush1.msra.mxu0 0.0
  %216 = vmatprep.subr.mxu0 0.0
  %217 = vmatpush1.msra.mxu0 0.0
  %218 = vmatprep.mubr.f32.mxu0 0.0
  %219 = vmatmul.mubr.f32.gmra.mrb[0].mxu0 %v149
  %v220 = vpop.f32.mrb[0].mxu0
  %v221 = vadd.f32 %v145, %v220
  %v222 = vpop.f32.mrb[0].mxu0
  %223 = vmatprep.mubr.f32.mxu0 0.0
  %224 = vmatmul.mubr.f32.gmra.mrb[0].mxu0 %v152
  %v225 = vpop.f32.mrb[0].mxu0
  %v226 = vadd.f32 %v145, %v225
  %v227 = vpop.f32.mrb[0].mxu0
  %228 = vdwg.mxu0
  %v229 = vtanh.pop %v221
  %v230 = vtanh.pop %v226
  %v231 = vld [vmem:[%s5] sm:$0x1]
  %v233 = vlaneseq
  %v234 = vshrl.u32 %v233, 7
  %v235 = vsub.s32 0, %v234
  %v236 = vrot.slane %v231, %v235
  %v238 = vmul.f32 %v229, %v236
  %v239 = vmul.f32 %v230, %v236
  %v240 = vsel %vm147, %v238, 0.0
  %241 = vadd.xlane.f32.xlu0 %v240
  %v242 = vpop.xlane.xlu0 %241
  %v243 = vsel %vm147, %v239, 0.0
  %244 = vadd.xlane.f32.xlu0 %v243
  %v245 = vpop.xlane.xlu0 %244
  %v246 = vld [vmem:[#allocation2] sm:$0x1]
  %v248 = vlaneseq
  %v249 = vshrl.u32 %v248, 7
  %v250 = vsub.s32 0, %v249
  %v251 = vrot.slane %v246, %v250
  %v253 = vadd.f32 %v242, %v251
  %v254 = vadd.f32 %v245, %v251
  %vm255 = vcmask 7168
  %256 = vst.msk [vmem:[%s9] sm:$0xff] %vm255, %v253
  %257 = vst.msk [vmem:[%s9 + $0x8] sm:$0xff] %vm255, %v254
  %v258 = vmul.f32 %v229, %v229
  %v259 = vmul.f32 %v230, %v230
  %v260 = vsub.f32 1.0, %v258
  %v261 = vsub.f32 1.0, %v259
  %v262 = vmul.f32 %v236, %v260
  %v263 = vmul.f32 %v236, %v261
  %v264 = vld [vmem:[%s7] sm:$0xff]
  %v265 = vld [vmem:[%s7 + $0x8] sm:$0xff]
  %v266 = vld [vmem:[%s7 + $0x10] sm:$0xff]
  %v267 = vld [vmem:[%s7 + $0x18] sm:$0xff]
  %v269 = vsel %vm147, %v262, 0
  %v272 = vsel %vm147, %v263, 0
  %274 = vmatprep.subr.mxu0 0.0
  %275 = vmatpush1.msra.mxu0 %v264
  %276 = vmatprep.subr.mxu0 0.0
  %277 = vmatpush1.msra.mxu0 %v265
  %278 = vmatprep.subr.mxu0 0.0
  %279 = vmatpush1.msra.mxu0 %v266
  %280 = vmatprep.subr.mxu0 0.0
  %281 = vmatpush1.msra.mxu0 %v267
  %282 = vmatprep.subr.mxu0 0.0
  %283 = vmatpush1.msra.mxu0 0.0
  %284 = vmatprep.subr.mxu0 0.0
  %285 = vmatpush1.msra.mxu0 0.0
  %286 = vmatprep.subr.mxu0 0.0
  %287 = vmatpush1.msra.mxu0 0.0
  %288 = vmatprep.subr.mxu0 0.0
  %289 = vmatpush1.msra.mxu0 0.0
  %290 = vmatprep.subr.mxu0 0.0
  %291 = vmatpush1.msra.mxu0 0.0
  %292 = vmatprep.subr.mxu0 0.0
  %293 = vmatpush1.msra.mxu0 0.0
  %294 = vmatprep.subr.mxu0 0.0
  %295 = vmatpush1.msra.mxu0 0.0
  %296 = vmatprep.subr.mxu0 0.0
  %297 = vmatpush1.msra.mxu0 0.0
  %298 = vmatprep.subr.mxu0 0.0
  %299 = vmatpush1.msra.mxu0 0.0
  %300 = vmatprep.subr.mxu0 0.0
  %301 = vmatpush1.msra.mxu0 0.0
  %302 = vmatprep.subr.mxu0 0.0
  %303 = vmatpush1.msra.mxu0 0.0
  %304 = vmatprep.subr.mxu0 0.0
  %305 = vmatpush1.msra.mxu0 0.0
  %306 = vmatprep.subr.mxu0 0.0
  %307 = vmatpush1.msra.mxu0 0.0
  %308 = vmatprep.subr.mxu0 0.0
  %309 = vmatpush1.msra.mxu0 0.0
  %310 = vmatprep.subr.mxu0 0.0
  %311 = vmatpush1.msra.mxu0 0.0
  %312 = vmatprep.subr.mxu0 0.0
  %313 = vmatpush1.msra.mxu0 0.0
  %314 = vmatprep.subr.mxu0 0.0
  %315 = vmatpush1.msra.mxu0 0.0
  %316 = vmatprep.subr.mxu0 0.0
  %317 = vmatpush1.msra.mxu0 0.0
  %318 = vmatprep.subr.mxu0 0.0
  %319 = vmatpush1.msra.mxu0 0.0
  %320 = vmatprep.subr.mxu0 0.0
  %321 = vmatpush1.msra.mxu0 0.0
  %322 = vmatprep.subr.mxu0 0.0
  %323 = vmatpush1.msra.mxu0 0.0
  %324 = vmatprep.subr.mxu0 0.0
  %325 = vmatpush1.msra.mxu0 0.0
  %326 = vmatprep.subr.mxu0 0.0
  %327 = vmatpush1.msra.mxu0 0.0
  %328 = vmatprep.subr.mxu0 0.0
  %329 = vmatpush1.msra.mxu0 0.0
  %330 = vmatprep.subr.mxu0 0.0
  %331 = vmatpush1.msra.mxu0 0.0
  %332 = vmatprep.subr.mxu0 0.0
  %333 = vmatpush1.msra.mxu0 0.0
  %334 = vmatprep.subr.mxu0 0.0
  %335 = vmatpush1.msra.mxu0 0.0
  %336 = vmatprep.subr.mxu0 0.0
  %337 = vmatpush1.msra.mxu0 0.0
  %338 = vmatprep.mubr.f32.mxu0 0.0
  %339 = vmatmul.mubr.f32.gmra.mrb[0].mxu0 %v269
  %v340 = vpop.f32.mrb[0].mxu0
  %v341 = vadd.f32 0.0, %v340
  %v342 = vpop.f32.mrb[0].mxu0
  %343 = vmatprep.mubr.f32.mxu0 0.0
  %344 = vmatmul.mubr.f32.gmra.mrb[0].mxu0 %v272
  %v345 = vpop.f32.mrb[0].mxu0
  %v346 = vadd.f32 0.0, %v345
  %v347 = vpop.f32.mrb[0].mxu0
  %348 = vdwg.mxu0
  %v349 = vmul.f32 %v134, %v134
  %v350 = vmul.f32 %v135, %v135
  %v351 = vsub.f32 1.0, %v349
  %v352 = vsub.f32 1.0, %v350
  %v353 = vmul.f32 %v341, %v351
  %v354 = vmul.f32 %v346, %v352
  %v355 = vld [vmem:[%s8] sm:$0xff]
  %v356 = vld [vmem:[%s8 + $0x8] sm:$0xff]
  %v357 = vld [vmem:[%s8 + $0x10] sm:$0xff]
  %v358 = vld [vmem:[%s8 + $0x18] sm:$0xff]
  %v360 = vsel %vm147, %v353, 0
  %v363 = vsel %vm147, %v354, 0
  %365 = vmatprep.subr.mxu0 0.0
  %366 = vmatpush1.msra.mxu0 %v355
  %367 = vmatprep.subr.mxu0 0.0
  %368 = vmatpush1.msra.mxu0 %v356
  %369 = vmatprep.subr.mxu0 0.0
  %370 = vmatpush1.msra.mxu0 %v357
  %371 = vmatprep.subr.mxu0 0.0
  %372 = vmatpush1.msra.mxu0 %v358
  %373 = vmatprep.subr.mxu0 0.0
  %374 = vmatpush1.msra.mxu0 0.0
  %375 = vmatprep.subr.mxu0 0.0
  %376 = vmatpush1.msra.mxu0 0.0
  %377 = vmatprep.subr.mxu0 0.0
  %378 = vmatpush1.msra.mxu0 0.0
  %379 = vmatprep.subr.mxu0 0.0
  %380 = vmatpush1.msra.mxu0 0.0
  %381 = vmatprep.subr.mxu0 0.0
  %382 = vmatpush1.msra.mxu0 0.0
  %383 = vmatprep.subr.mxu0 0.0
  %384 = vmatpush1.msra.mxu0 0.0
  %385 = vmatprep.subr.mxu0 0.0
  %386 = vmatpush1.msra.mxu0 0.0
  %387 = vmatprep.subr.mxu0 0.0
  %388 = vmatpush1.msra.mxu0 0.0
  %389 = vmatprep.subr.mxu0 0.0
  %390 = vmatpush1.msra.mxu0 0.0
  %391 = vmatprep.subr.mxu0 0.0
  %392 = vmatpush1.msra.mxu0 0.0
  %393 = vmatprep.subr.mxu0 0.0
  %394 = vmatpush1.msra.mxu0 0.0
  %395 = vmatprep.subr.mxu0 0.0
  %396 = vmatpush1.msra.mxu0 0.0
  %397 = vmatprep.subr.mxu0 0.0
  %398 = vmatpush1.msra.mxu0 0.0
  %399 = vmatprep.subr.mxu0 0.0
  %400 = vmatpush1.msra.mxu0 0.0
  %401 = vmatprep.subr.mxu0 0.0
  %402 = vmatpush1.msra.mxu0 0.0
  %403 = vmatprep.subr.mxu0 0.0
  %404 = vmatpush1.msra.mxu0 0.0
  %405 = vmatprep.subr.mxu0 0.0
  %406 = vmatpush1.msra.mxu0 0.0
  %407 = vmatprep.subr.mxu0 0.0
  %408 = vmatpush1.msra.mxu0 0.0
  %409 = vmatprep.subr.mxu0 0.0
  %410 = vmatpush1.msra.mxu0 0.0
  %411 = vmatprep.subr.mxu0 0.0
  %412 = vmatpush1.msra.mxu0 0.0
  %413 = vmatprep.subr.mxu0 0.0
  %414 = vmatpush1.msra.mxu0 0.0
  %415 = vmatprep.subr.mxu0 0.0
  %416 = vmatpush1.msra.mxu0 0.0
  %417 = vmatprep.subr.mxu0 0.0
  %418 = vmatpush1.msra.mxu0 0.0
  %419 = vmatprep.subr.mxu0 0.0
  %420 = vmatpush1.msra.mxu0 0.0
  %421 = vmatprep.subr.mxu0 0.0
  %422 = vmatpush1.msra.mxu0 0.0
  %423 = vmatprep.subr.mxu0 0.0
  %424 = vmatpush1.msra.mxu0 0.0
  %425 = vmatprep.subr.mxu0 0.0
  %426 = vmatpush1.msra.mxu0 0.0
  %427 = vmatprep.subr.mxu0 0.0
  %428 = vmatpush1.msra.mxu0 0.0
  %429 = vmatprep.mubr.f32.mxu0 0.0
  %430 = vmatmul.mubr.f32.gmra.mrb[0].mxu0 %v360
  %v431 = vpop.f32.mrb[0].mxu0
  %v432 = vadd.f32 0.0, %v431
  %v433 = vpop.f32.mrb[0].mxu0
  %434 = vmatprep.mubr.f32.mxu0 0.0
  %435 = vmatmul.mubr.f32.gmra.mrb[0].mxu0 %v363
  %v436 = vpop.f32.mrb[0].mxu0
  %v437 = vadd.f32 0.0, %v436
  %v438 = vpop.f32.mrb[0].mxu0
  %439 = vdwg.mxu0
  %440 = vst.msk [vmem:[%s10] sm:$0xff] %vm48, %v432
  %441 = vst.msk [vmem:[%s10 + $0x8] sm:$0xff] %vm48, %v437
  // Predicated region
  $region38: #{jvp__.1} parent=0 // pred_check
    _
  $region39: #{jvp__.1} parent=0 // pred_check_branch
    %443 = sbr.rel (0) target = $region41
  $region40: #{jvp__.1} parent=0 // pred_region
    _
  $region41: #{jvp__.1} parent=0 // pred_fallthru
    _
  // Predicated region
  $region42: #{jvp__.1} parent=0 // pred_check
    _
  $region43: #{jvp__.1} parent=0 // pred_check_branch
    %445 = sbr.rel (0) target = $region45
  $region44: #{jvp__.1} parent=0 // pred_region
    _
  $region45: #{jvp__.1} parent=0 // pred_fallthru
    _
  // Predicated region
  $region46: #{jvp__.1} parent=0 // pred_check
    _
  $region47: #{jvp__.1} parent=0 // pred_check_branch
    %447 = sbr.rel (0) target = $region49
  $region48: #{jvp__.1} parent=0 // pred_region
    _
  $region49: #{jvp__.1} parent=0 // pred_fallthru
    _
  // Predicated region
  $region50: #{jvp__.1} parent=0 // pred_check
    _
  $region51: #{jvp__.1} parent=0 // pred_check_branch
    %449 = sbr.rel (0) target = $region53
  $region52: #{jvp__.1} parent=0 // pred_region
    _
  $region53: #{jvp__.1} parent=0 // pred_fallthru
    _

</llo_original>
